<compile_context>
chip_gen: v7x
topology: tpu7x:2x2x1
jax: 0.10.0
libtpu: 0.0.40
codegen_flags: <defaults>
</compile_context>

<pallas_src>
import math

import jax
import jax.numpy as jnp
from jax.experimental import pallas as pl
from jax.experimental.pallas import tpu as pltpu


def _round_up(x, m):
    return ((x + m - 1) // m) * m


def critic_kernel(s_ref, a_ref, w1s_ref, w1a_ref, b1_ref, w2_ref, b2_ref,
                  w3_ref, b3_ref, q_ref):
    # fc1 with the concat folded in: concat([s, a]) @ W1 == s @ W1_s + a @ W1_a.
    # bf16 MXU inputs, f32 accumulation + epilogue.
    h1 = (jnp.dot(s_ref[...], w1s_ref[...], preferred_element_type=jnp.float32)
          + jnp.dot(a_ref[...], w1a_ref[...], preferred_element_type=jnp.float32)
          + b1_ref[...])
    h1 = jnp.maximum(h1, 0.0)                                        # ReLU (VPU)

    # fc2: bf16 MXU inputs, f32 accumulation + epilogue.
    h2 = jnp.dot(h1.astype(jnp.bfloat16), w2_ref[...],
                 preferred_element_type=jnp.float32) + b2_ref[...]
    h2 = jnp.maximum(h2, 0.0)                                        # ReLU (VPU)

    # fc3 has out_features == 1: lane reduction (VPU/XLU) instead of an MXU
    # matmul that would use 1/256 of the MXU columns.  f32 throughout.
    q = jnp.sum(h2 * w3_ref[...], axis=-1, keepdims=True)            # (TB, 1)

    # Narrow (TB, 1) store: HBM write bytes == real data (no slab broadcast).
    q_ref[...] = q + b3_ref[...]


def critic_forward(state, action, padded_params, *, batch_tile=2048):
    """Pallas-backed forward pass of the Critic Q-network. Returns (B, 1) f32."""
    w1s, w1a, b1, w2, b2, w3, b3 = padded_params
    B = state.shape[0]
    Sp, Hp = w1s.shape
    Ap = w1a.shape[0]

    # --- Waste-aware batch tiling (multiples of 16: bf16 sublane packing). ---
    B16 = _round_up(B, 16)
    n_tiles = pl.cdiv(B16, batch_tile)          # respect the per-tile cap
    if n_tiles < 2 and B16 >= 256:
        n_tiles = 2                             # v7x: let both TCs get a tile
    TB = _round_up(pl.cdiv(B16, n_tiles), 16)
    B_pad = _round_up(B16, TB)
    grid = B_pad // TB

    # Pad + cast the streamed activations to bf16 (halves HBM read bytes).
    def _pad_cast(x, rows, cols):
        x = x.astype(jnp.bfloat16)
        pr, pc = rows - x.shape[0], cols - x.shape[1]
        if pr or pc:
            x = jnp.pad(x, ((0, pr), (0, pc)))
        return x

    state_p = _pad_cast(state, B_pad, Sp)
    action_p = _pad_cast(action, B_pad, Ap)

    batch_map = lambda i: (i, 0)   # streamed activations / output
    resident = lambda i: (0, 0)    # weights stay put in VMEM across the grid

    flops = int(2 * B_pad * Hp * (Sp + Ap + Hp + 1))
    bytes_accessed = int(
        (state_p.size + action_p.size + w1s.size + w1a.size + w2.size) * 2
        + (b1.size + b2.size + w3.size + b3.size) * 4
        + B_pad * 4
    )

    out = pl.pallas_call(
        critic_kernel,
        out_shape=jax.ShapeDtypeStruct((B_pad, 1), jnp.float32),
        grid=(grid,),
        in_specs=[
            pl.BlockSpec((TB, Sp), batch_map),   # state tile (bf16)
            pl.BlockSpec((TB, Ap), batch_map),   # action tile (bf16)
            pl.BlockSpec((Sp, Hp), resident),    # W1_state (bf16)
            pl.BlockSpec((Ap, Hp), resident),    # W1_action (bf16)
            pl.BlockSpec((1, Hp), resident),     # b1 (f32)
            pl.BlockSpec((Hp, Hp), resident),    # W2 (bf16)
            pl.BlockSpec((1, Hp), resident),     # b2 (f32)
            pl.BlockSpec((1, Hp), resident),     # W3 row (f32, VPU multiply)
            pl.BlockSpec((1, 1), resident),      # b3 scalar (f32)
        ],
        out_specs=pl.BlockSpec((TB, 1), batch_map),
        compiler_params=pltpu.CompilerParams(
            dimension_semantics=("parallel",),
        ),
        cost_estimate=pl.CostEstimate(
            flops=flops, transcendentals=0, bytes_accessed=bytes_accessed),
    )(state_p, action_p, w1s, w1a, b1, w2, b2, w3, b3)

    return out[:B]


def kaiming_uniform(key, fan_in, fan_out):
    """Kaiming-uniform (nonlinearity='relu'), stored as (in, out)."""
    bound = math.sqrt(6.0 / fan_in)  # gain sqrt(2) * sqrt(3 / fan_in)
    return jax.random.uniform(
        key, (fan_in, fan_out), dtype=jnp.float32, minval=-bound, maxval=bound
    )


def init_critic_params(key, state_dim, action_dim, hidden_dim):
    """Unpadded f32 params, layout (in_features, out_features); matches the
    PyTorch module's init (Kaiming-uniform weights, zero biases)."""
    in_dim = state_dim + action_dim
    k1, k2, k3 = jax.random.split(key, 3)
    w1 = kaiming_uniform(k1, in_dim, hidden_dim)
    b1 = jnp.zeros((hidden_dim,), jnp.float32)
    w2 = kaiming_uniform(k2, hidden_dim, hidden_dim)
    b2 = jnp.zeros((hidden_dim,), jnp.float32)
    w3 = kaiming_uniform(k3, hidden_dim, 1)
    b3 = jnp.zeros((1,), jnp.float32)
    return (w1, b1, w2, b2, w3, b3)


def pad_critic_params(params, state_dim, action_dim):
    """Split W1 (fold the concat into the kernel), zero-pad to MXU/vreg
    friendly shapes (K dims -> mult of 16, hidden -> mult of 128), and cast
    the MXU operands to bf16 (biases / W3 / b3 stay f32 for the epilogue)."""
    w1, b1, w2, b2, w3, b3 = params
    hidden = w2.shape[0]
    Sp = _round_up(state_dim, 16)
    Ap = _round_up(action_dim, 16)
    Hp = _round_up(hidden, 128)

    def pad2(x, rows, cols):
        return jnp.pad(x, ((0, rows - x.shape[0]), (0, cols - x.shape[1])))

    w1s = pad2(w1[:state_dim, :], Sp, Hp).astype(jnp.bfloat16)
    w1a = pad2(w1[state_dim:, :], Ap, Hp).astype(jnp.bfloat16)
    b1p = pad2(b1.reshape(1, -1), 1, Hp)                 # f32
    w2p = pad2(w2, Hp, Hp).astype(jnp.bfloat16)
    b2p = pad2(b2.reshape(1, -1), 1, Hp)                 # f32
    w3p = pad2(w3.T, 1, Hp)                              # (1, Hp) f32 row
    b3p = b3.reshape(1, 1).astype(jnp.float32)           # (1, 1) f32
    return (w1s, w1a, b1p, w2p, b2p, w3p, b3p)


if __name__ == "__main__":
    # Small shapes consistent with the Critic module (CartPole-like dims).
    batch, state_dim, action_dim, hidden_dim = 2, 4, 1, 32

    key = jax.random.PRNGKey(0)
    k_params, k_state, k_action = jax.random.split(key, 3)

    params = init_critic_params(k_params, state_dim, action_dim, hidden_dim)
    padded = pad_critic_params(params, state_dim, action_dim)

    state = jax.random.normal(k_state, (batch, state_dim), dtype=jnp.float32)
    action = jax.random.normal(k_action, (batch, action_dim), dtype=jnp.float32)

    q = critic_forward(state, action, padded)
    jax.block_until_ready(q)

    # Pure-JAX f32 reference (same math as the PyTorch module, no Pallas).
    w1, b1, w2, b2, w3, b3 = params
    x = jnp.concatenate([state, action], axis=-1)
    h = jnp.maximum(x @ w1 + b1, 0.0)
    h = jnp.maximum(h @ w2 + b2, 0.0)
    q_ref = h @ w3 + b3

    assert q.shape == (batch, 1)
    # bf16 MXU inputs with f32 accumulation -> loosened tolerance vs f32 ref.
    assert jnp.allclose(q, q_ref, atol=5e-2, rtol=5e-2), (q, q_ref)

    print("KERNEL_OK")
</pallas_src>

<mosaic_0001>
module attributes {stable_mosaic.version = 11 : i64} {
  func.func @critic_kernel(%arg0: i32, %arg1: memref<16x16xbf16, #tpu.memory_space<vmem>>, %arg2: memref<16x16xbf16, #tpu.memory_space<vmem>>, %arg3: memref<16x128xbf16, #tpu.memory_space<vmem>>, %arg4: memref<16x128xbf16, #tpu.memory_space<vmem>>, %arg5: memref<1x128xf32, #tpu.memory_space<vmem>>, %arg6: memref<128x128xbf16, #tpu.memory_space<vmem>>, %arg7: memref<1x128xf32, #tpu.memory_space<vmem>>, %arg8: memref<1x128xf32, #tpu.memory_space<vmem>>, %arg9: memref<1x1xf32, #tpu.memory_space<vmem>>, %arg10: memref<16x1xf32, #tpu.memory_space<vmem>>) attributes {dimension_semantics = [#tpu.dimension_semantics<parallel>], iteration_bounds = array<i64: 1>, scalar_prefetch = 0 : i64, scratch_operands = 0 : i64, tpu.core_type = #tpu.core_type<tc>, window_params = [{transform_indices = @transform_0, window_bounds = array<i64: 16, 16>}, {transform_indices = @transform_1, window_bounds = array<i64: 16, 16>}, {pipeline_mode = #tpu.pipeline_mode<synchronous>, transform_indices = @transform_2, window_bounds = array<i64: 16, 128>}, {pipeline_mode = #tpu.pipeline_mode<synchronous>, transform_indices = @transform_3, window_bounds = array<i64: 16, 128>}, {pipeline_mode = #tpu.pipeline_mode<synchronous>, transform_indices = @transform_4, window_bounds = array<i64: 1, 128>}, {pipeline_mode = #tpu.pipeline_mode<synchronous>, transform_indices = @transform_5, window_bounds = array<i64: 128, 128>}, {pipeline_mode = #tpu.pipeline_mode<synchronous>, transform_indices = @transform_6, window_bounds = array<i64: 1, 128>}, {pipeline_mode = #tpu.pipeline_mode<synchronous>, transform_indices = @transform_7, window_bounds = array<i64: 1, 128>}, {pipeline_mode = #tpu.pipeline_mode<synchronous>, transform_indices = @transform_8, window_bounds = array<i64: 1, 1>}, {transform_indices = @transform_9, window_bounds = array<i64: 16, 1>}]} {
    %c0 = arith.constant 0 : index
    %c0_0 = arith.constant 0 : index
    %0 = vector.load %arg1[%c0, %c0_0] : memref<16x16xbf16, #tpu.memory_space<vmem>>, vector<16x16xbf16>
    %c0_1 = arith.constant 0 : index
    %c0_2 = arith.constant 0 : index
    %1 = vector.load %arg3[%c0_1, %c0_2] : memref<16x128xbf16, #tpu.memory_space<vmem>>, vector<16x128xbf16>
    %cst = arith.constant dense<0.000000e+00> : vector<16x128xf32>
    %2 = tpu.matmul %0, %1, %cst {dimension_numbers = #tpu.dot_dimension_numbers<[1], [0], [0], [1], [0, 0, 1, 1], [], []>} : vector<16x16xbf16>, vector<16x128xbf16>, vector<16x128xf32> -> vector<16x128xf32>
    %c0_3 = arith.constant 0 : index
    %c0_4 = arith.constant 0 : index
    %3 = vector.load %arg2[%c0_3, %c0_4] : memref<16x16xbf16, #tpu.memory_space<vmem>>, vector<16x16xbf16>
    %c0_5 = arith.constant 0 : index
    %c0_6 = arith.constant 0 : index
    %4 = vector.load %arg4[%c0_5, %c0_6] : memref<16x128xbf16, #tpu.memory_space<vmem>>, vector<16x128xbf16>
    %cst_7 = arith.constant dense<0.000000e+00> : vector<16x128xf32>
    %5 = tpu.matmul %3, %4, %cst_7 {dimension_numbers = #tpu.dot_dimension_numbers<[1], [0], [0], [1], [0, 0, 1, 1], [], []>} : vector<16x16xbf16>, vector<16x128xbf16>, vector<16x128xf32> -> vector<16x128xf32>
    %6 = arith.addf %2, %5 : vector<16x128xf32>
    %c0_8 = arith.constant 0 : index
    %c0_9 = arith.constant 0 : index
    %7 = vector.load %arg5[%c0_8, %c0_9] : memref<1x128xf32, #tpu.memory_space<vmem>>, vector<1x128xf32>
    %8 = vector.broadcast %7 : vector<1x128xf32> to vector<16x128xf32>
    %9 = arith.addf %6, %8 : vector<16x128xf32>
    %cst_10 = arith.constant 0.000000e+00 : f32
    %10 = vector.broadcast %cst_10 : f32 to vector<16x128xf32>
    %11 = arith.maximumf %9, %10 : vector<16x128xf32>
    %12 = arith.truncf %11 : vector<16x128xf32> to vector<16x128xbf16>
    %c0_11 = arith.constant 0 : index
    %c0_12 = arith.constant 0 : index
    %13 = vector.load %arg6[%c0_11, %c0_12] : memref<128x128xbf16, #tpu.memory_space<vmem>>, vector<128x128xbf16>
    %cst_13 = arith.constant dense<0.000000e+00> : vector<16x128xf32>
    %14 = tpu.matmul %12, %13, %cst_13 {dimension_numbers = #tpu.dot_dimension_numbers<[1], [0], [0], [1], [0, 0, 1, 1], [], []>} : vector<16x128xbf16>, vector<128x128xbf16>, vector<16x128xf32> -> vector<16x128xf32>
    %c0_14 = arith.constant 0 : index
    %c0_15 = arith.constant 0 : index
    %15 = vector.load %arg7[%c0_14, %c0_15] : memref<1x128xf32, #tpu.memory_space<vmem>>, vector<1x128xf32>
    %16 = vector.broadcast %15 : vector<1x128xf32> to vector<16x128xf32>
    %17 = arith.addf %14, %16 : vector<16x128xf32>
    %cst_16 = arith.constant 0.000000e+00 : f32
    %18 = vector.broadcast %cst_16 : f32 to vector<16x128xf32>
    %19 = arith.maximumf %17, %18 : vector<16x128xf32>
    %c0_17 = arith.constant 0 : index
    %c0_18 = arith.constant 0 : index
    %20 = vector.load %arg8[%c0_17, %c0_18] : memref<1x128xf32, #tpu.memory_space<vmem>>, vector<1x128xf32>
    %21 = vector.broadcast %20 : vector<1x128xf32> to vector<16x128xf32>
    %22 = arith.mulf %19, %21 : vector<16x128xf32>
    %cst_19 = arith.constant dense<0.000000e+00> : vector<16xf32>
    %23 = vector.multi_reduction <add>, %22, %cst_19 [1] : vector<16x128xf32> to vector<16xf32>
    %24 = vector.shape_cast %23 : vector<16xf32> to vector<16x1xf32>
    %c0_20 = arith.constant 0 : index
    %c0_21 = arith.constant 0 : index
    %25 = vector.load %arg9[%c0_20, %c0_21] : memref<1x1xf32, #tpu.memory_space<vmem>>, vector<1x1xf32>
    %26 = vector.broadcast %25 : vector<1x1xf32> to vector<16x1xf32>
    %27 = arith.addf %24, %26 : vector<16x1xf32>
    %c0_22 = arith.constant 0 : index
    %c0_23 = arith.constant 0 : index
    %28 = vector.load %arg10[%c0_22, %c0_23] : memref<16x1xf32, #tpu.memory_space<vmem>>, vector<16x1xf32>
    tpu.vector_store %arg10[%c0_22, %c0_23], %27 {strides = array<i32>} : memref<16x1xf32, #tpu.memory_space<vmem>>, vector<16x1xf32>,
    return
  }
  func.func @transform_0(%arg0: i32) -> (i32, i32) {
    %c0_i32 = arith.constant 0 : i32
    %c0_i32_0 = arith.constant 0 : i32
    return %arg0, %c0_i32 : i32, i32
  }
  func.func @transform_1(%arg0: i32) -> (i32, i32) {
    %c0_i32 = arith.constant 0 : i32
    %c0_i32_0 = arith.constant 0 : i32
    return %arg0, %c0_i32 : i32, i32
  }
  func.func @transform_2(%arg0: i32) -> (i32, i32) {
    %c0_i32 = arith.constant 0 : i32
    %c0_i32_0 = arith.constant 0 : i32
    %c0_i32_1 = arith.constant 0 : i32
    return %c0_i32, %c0_i32_0 : i32, i32
  }
  func.func @transform_3(%arg0: i32) -> (i32, i32) {
    %c0_i32 = arith.constant 0 : i32
    %c0_i32_0 = arith.constant 0 : i32
    %c0_i32_1 = arith.constant 0 : i32
    return %c0_i32, %c0_i32_0 : i32, i32
  }
  func.func @transform_4(%arg0: i32) -> (i32, i32) {
    %c0_i32 = arith.constant 0 : i32
    %c0_i32_0 = arith.constant 0 : i32
    %c0_i32_1 = arith.constant 0 : i32
    return %c0_i32, %c0_i32_0 : i32, i32
  }
  func.func @transform_5(%arg0: i32) -> (i32, i32) {
    %c0_i32 = arith.constant 0 : i32
    %c0_i32_0 = arith.constant 0 : i32
    %c0_i32_1 = arith.constant 0 : i32
    return %c0_i32, %c0_i32_0 : i32, i32
  }
  func.func @transform_6(%arg0: i32) -> (i32, i32) {
    %c0_i32 = arith.constant 0 : i32
    %c0_i32_0 = arith.constant 0 : i32
    %c0_i32_1 = arith.constant 0 : i32
    return %c0_i32, %c0_i32_0 : i32, i32
  }
  func.func @transform_7(%arg0: i32) -> (i32, i32) {
    %c0_i32 = arith.constant 0 : i32
    %c0_i32_0 = arith.constant 0 : i32
    %c0_i32_1 = arith.constant 0 : i32
    return %c0_i32, %c0_i32_0 : i32, i32
  }
  func.func @transform_8(%arg0: i32) -> (i32, i32) {
    %c0_i32 = arith.constant 0 : i32
    %c0_i32_0 = arith.constant 0 : i32
    %c0_i32_1 = arith.constant 0 : i32
    return %c0_i32, %c0_i32_0 : i32, i32
  }
  func.func @transform_9(%arg0: i32) -> (i32, i32) {
    %c0_i32 = arith.constant 0 : i32
    %c0_i32_0 = arith.constant 0 : i32
    return %arg0, %c0_i32 : i32, i32
  }
}

</mosaic_0001>

<llo_original>
// kernel: tpu_custom_call.1
$region0: #{tpu_custom_call.1}
  #allocation0 [shape = 'u32[]', space=smem, size = 0x4, offset = 0x4, fixed_abs, tag = 'smem constant byte address 0x4 - core index']
  #allocation1 [shape = 'u32[144,128]{1,0:T(1,128)}', space=vmem, size = 0x12000, scoped, tag = 'internal scratch']
  #allocation2 [shape = 'f32[1,1]{1,0:T(1,128)S(1)}', space=vmem, size = 0x200, scoped, tag = 'scoped memory for tpu_custom_call.1']
  %s0 = inlined_call_operand.hbm [shape: bf16[16,16], index: 0, kind: input, shape index: {}]
  %s1 = inlined_call_operand.hbm [shape: bf16[16,16], index: 1, kind: input, shape index: {}]
  %s2 = inlined_call_operand.vmem [shape: bf16[16,128], index: 2, kind: input, shape index: {}]
  %s3 = inlined_call_operand.hbm [shape: bf16[16,128], index: 3, kind: input, shape index: {}]
  %s4 = inlined_call_operand.vmem [shape: f32[1,128], index: 4, kind: input, shape index: {}]
  %s5 = inlined_call_operand.hbm [shape: bf16[128,128], index: 5, kind: input, shape index: {}]
  %s6 = inlined_call_operand.vmem [shape: f32[1,128], index: 6, kind: input, shape index: {}]
  %s7 = inlined_call_operand.vmem [shape: f32[1,128], index: 7, kind: input, shape index: {}]
  %s8 = inlined_call_operand.<no memory space> [shape: f32[1,1], index: 8, kind: input, shape index: {}]
  %s9 = inlined_call_operand.vmem [shape: f32[16,1], index: 9, kind: output, shape index: {}]
  %s10 = sld [smem:[#allocation0]]
  $region62: #{tpu_custom_call.1} parent=0
    _
  %s12 = ssub.s32 1, %s10
  %s13 = scalar_select 0, %s12, %s10
  %v14 = vstv %s8
  %15 = vst [vmem:[#allocation2] sm:$0x1] %v14
  $region1: #{tpu_custom_call.1} parent=0
    #allocation3 [shape = 'u8[4096]{0}', space=vmem, size = 0x1000, scoped, tag = 'input window, operand 0, single buffered']
    #allocation4 [shape = 's32[1]{0}', space=sflag, size = 0x4, scoped, tag = 'scoped memory for tpu_custom_call.1']
    #allocation5 [shape = 'u8[4096]{0}', space=vmem, size = 0x1000, scoped, tag = 'input window, operand 1, single buffered']
    #allocation6 [shape = 's32[1]{0}', space=sflag, size = 0x4, scoped, tag = 'scoped memory for tpu_custom_call.1']
    #allocation7 [shape = 'u8[4096]{0}', space=vmem, size = 0x1000, scoped, tag = 'input window, operand 3, single buffered']
    #allocation8 [shape = 'u8[32768]{0}', space=vmem, size = 0x8000, scoped, tag = 'input window, operand 5, single buffered']
    #allocation9 [shape = 's32[1]{0}', space=sflag, size = 0x4, scoped, tag = 'scoped memory for tpu_custom_call.1']
    %16 = vsyncpa [#allocation4], 0
    %17 = vsyncpa [#allocation6], 0
    %18 = vsyncpa [#allocation9], 0
    // Predicated region
    $region2: #{tpu_custom_call.1} parent=1 // pred_check
      _
    $region3: #{tpu_custom_call.1} parent=1 // pred_check_branch
      %20 = sbr.rel (0) target = $region5
    $region4: #{tpu_custom_call.1} parent=1 // pred_region
      %s22 = ssub.s32 128, 128
      %23 = vsyncadd [#allocation4], %s22
      %s24 = sshll.u32 [#allocation3], 4
      %s25 = int_to_ptr.vmem [resolvable:$true] %s24
      %30 = dma.hbm_to_vmem [thread:$0]  %s0, 128, %s25, [#allocation4], 64, 64, 4
    $region5: #{tpu_custom_call.1} parent=1 // pred_fallthru
      _
    // Predicated region
    $region6: #{tpu_custom_call.1} parent=1 // pred_check
      _
    $region7: #{tpu_custom_call.1} parent=1 // pred_check_branch
      %32 = sbr.rel (0) target = $region9
    $region8: #{tpu_custom_call.1} parent=1 // pred_region
      %s34 = ssub.s32 128, 128
      %35 = vsyncadd [#allocation6], %s34
      %s36 = sshll.u32 [#allocation5], 4
      %s37 = int_to_ptr.vmem [resolvable:$true] %s36
      %42 = dma.hbm_to_vmem [thread:$0]  %s1, 128, %s37, [#allocation6], 64, 64, 4
    $region9: #{tpu_custom_call.1} parent=1 // pred_fallthru
      _
    // Predicated region
    $region10: #{tpu_custom_call.1} parent=1 // pred_check
      _
    $region11: #{tpu_custom_call.1} parent=1 // pred_check_branch
      %44 = sbr.rel (0) target = $region13
    $region12: #{tpu_custom_call.1} parent=1 // pred_region
      _
    $region13: #{tpu_custom_call.1} parent=1 // pred_fallthru
      _
    // Predicated region
    $region14: #{tpu_custom_call.1} parent=1 // pred_check
      _
    $region15: #{tpu_custom_call.1} parent=1 // pred_check_branch
      %46 = sbr.rel (0) target = $region17
    $region16: #{tpu_custom_call.1} parent=1 // pred_region
      %s48 = ssub.s32 128, 128
      %49 = vsyncadd [#allocation6], %s48
      %s50 = sshll.u32 [#allocation7], 4
      %s51 = int_to_ptr.vmem [resolvable:$true] %s50
      %56 = dma.hbm_to_vmem [thread:$0]  %s3, 128, %s51, [#allocation6], 64, 64, 4
    $region17: #{tpu_custom_call.1} parent=1 // pred_fallthru
      _
    // Predicated region
    $region18: #{tpu_custom_call.1} parent=1 // pred_check
      _
    $region19: #{tpu_custom_call.1} parent=1 // pred_check_branch
      %58 = sbr.rel (0) target = $region21
    $region20: #{tpu_custom_call.1} parent=1 // pred_region
      _
    $region21: #{tpu_custom_call.1} parent=1 // pred_fallthru
      _
    // Predicated region
    $region22: #{tpu_custom_call.1} parent=1 // pred_check
      _
    $region23: #{tpu_custom_call.1} parent=1 // pred_check_branch
      %60 = sbr.rel (0) target = $region25
    $region24: #{tpu_custom_call.1} parent=1 // pred_region
      %s62 = ssub.s32 1024, 1024
      %63 = vsyncadd [#allocation9], %s62
      %s64 = sshll.u32 [#allocation8], 4
      %s65 = int_to_ptr.vmem [resolvable:$true] %s64
      %70 = dma.hbm_to_vmem [thread:$0]  %s5, 1024, %s65, [#allocation9], 64, 64, 4
    $region25: #{tpu_custom_call.1} parent=1 // pred_fallthru
      _
    // Predicated region
    $region26: #{tpu_custom_call.1} parent=1 // pred_check
      _
    $region27: #{tpu_custom_call.1} parent=1 // pred_check_branch
      %72 = sbr.rel (0) target = $region29
    $region28: #{tpu_custom_call.1} parent=1 // pred_region
      _
    $region29: #{tpu_custom_call.1} parent=1 // pred_fallthru
      _
    // Predicated region
    $region30: #{tpu_custom_call.1} parent=1 // pred_check
      _
    $region31: #{tpu_custom_call.1} parent=1 // pred_check_branch
      %74 = sbr.rel (0) target = $region33
    $region32: #{tpu_custom_call.1} parent=1 // pred_region
      _
    $region33: #{tpu_custom_call.1} parent=1 // pred_fallthru
      _
    // Predicated region
    $region34: #{tpu_custom_call.1} parent=1 // pred_check
      _
    $region35: #{tpu_custom_call.1} parent=1 // pred_check_branch
      %76 = sbr.rel (0) target = $region37
    $region36: #{tpu_custom_call.1} parent=1 // pred_region
      _
    $region37: #{tpu_custom_call.1} parent=1 // pred_fallthru
      _
    // Predicated region
    $region38: #{tpu_custom_call.1} parent=1 // pred_check
      _
    $region39: #{tpu_custom_call.1} parent=1 // pred_check_branch
      %78 = sbr.rel (0) target = $region41
    $region40: #{tpu_custom_call.1} parent=1 // pred_region
      %79 = dma.done [#allocation4], 128
    $region41: #{tpu_custom_call.1} parent=1 // pred_fallthru
      _
    // Predicated region
    $region42: #{tpu_custom_call.1} parent=1 // pred_check
      _
    $region43: #{tpu_custom_call.1} parent=1 // pred_check_branch
      %81 = sbr.rel (0) target = $region45
    $region44: #{tpu_custom_call.1} parent=1 // pred_region
      %82 = dma.done [#allocation6], 128
    $region45: #{tpu_custom_call.1} parent=1 // pred_fallthru
      _
    // Predicated region
    $region46: #{tpu_custom_call.1} parent=1 // pred_check
      _
    $region47: #{tpu_custom_call.1} parent=1 // pred_check_branch
      %84 = sbr.rel (0) target = $region49
    $region48: #{tpu_custom_call.1} parent=1 // pred_region
      %85 = dma.done [#allocation6], 128
    $region49: #{tpu_custom_call.1} parent=1 // pred_fallthru
      _
    // Predicated region
    $region50: #{tpu_custom_call.1} parent=1 // pred_check
      _
    $region51: #{tpu_custom_call.1} parent=1 // pred_check_branch
      %87 = sbr.rel (0) target = $region53
    $region52: #{tpu_custom_call.1} parent=1 // pred_region
      %88 = dma.done [#allocation9], 1024
    $region53: #{tpu_custom_call.1} parent=1 // pred_fallthru
      _
    %v90 = vld [vmem:[#allocation3] sm:$0xf]
    %v91 = vld [vmem:[#allocation3 + $0x4] sm:$0xf]
    %v92 = vld [vmem:[%s2] sm:$0xf]
    %v93 = vld [vmem:[%s2 + $0x4] sm:$0xf]
    %v94 = vld [vmem:[#allocation5] sm:$0xf]
    %v95 = vld [vmem:[#allocation5 + $0x4] sm:$0xf]
    %v96 = vld [vmem:[#allocation7] sm:$0xf]
    %v97 = vld [vmem:[#allocation7 + $0x4] sm:$0xf]
    %v100 = vunpack.c.l.b16 %v94
    %v101 = vunpack.c.l.b16 %v95
    %v102 = vpack.c.b16 %v101, %v100
    %v105 = vunpack.c.l.b16 %v96
    %v106 = vunpack.c.l.b16 %v97
    %v107 = vpack.c.b16 %v106, %v105
    %vm109 = vcmask 130048
    %v111 = vsel %vm109, %v102, 0
    %113 = vmatprep.subr.bf16.mxu0 0
    %114 = vmatpush1.bf16.msra.mxu0 %v107
    %115 = vmatprep.subr.bf16.mxu0 0
    %116 = vmatpush1.bf16.msra.mxu0 0
    %117 = vmatprep.subr.bf16.mxu0 0
    %118 = vmatpush1.bf16.msra.mxu0 0
    %119 = vmatprep.subr.bf16.mxu0 0
    %120 = vmatpush1.bf16.msra.mxu0 0
    %121 = vmatprep.subr.bf16.mxu0 0
    %122 = vmatpush1.bf16.msra.mxu0 0
    %123 = vmatprep.subr.bf16.mxu0 0
    %124 = vmatpush1.bf16.msra.mxu0 0
    %125 = vmatprep.subr.bf16.mxu0 0
    %126 = vmatpush1.bf16.msra.mxu0 0
    %127 = vmatprep.subr.bf16.mxu0 0
    %128 = vmatpush1.bf16.msra.mxu0 0
    %129 = vmatprep.subr.bf16.mxu0 0
    %130 = vmatpush1.bf16.msra.mxu0 0
    %131 = vmatprep.subr.bf16.mxu0 0
    %132 = vmatpush1.bf16.msra.mxu0 0
    %133 = vmatprep.subr.bf16.mxu0 0
    %134 = vmatpush1.bf16.msra.mxu0 0
    %135 = vmatprep.subr.bf16.mxu0 0
    %136 = vmatpush1.bf16.msra.mxu0 0
    %137 = vmatprep.subr.bf16.mxu0 0
    %138 = vmatpush1.bf16.msra.mxu0 0
    %139 = vmatprep.subr.bf16.mxu0 0
    %140 = vmatpush1.bf16.msra.mxu0 0
    %141 = vmatprep.subr.bf16.mxu0 0
    %142 = vmatpush1.bf16.msra.mxu0 0
    %143 = vmatprep.subr.bf16.mxu0 0
    %144 = vmatpush1.bf16.msra.mxu0 0
    %145 = vmatprep.mubr.bf16.mxu0 0
    %146 = vmatmul.mubr.bf16.gmra.mrb[0].mxu0 %v111
    %v147 = vpop.f32.mrb[0].mxu0
    %v148 = vadd.f32 0.0, %v147
    %v149 = vpop.f32.mrb[0].mxu0
    %v150 = vpop.f32.mrb[0].mxu0
    %v151 = vadd.f32 0.0, %v150
    %v152 = vpop.f32.mrb[0].mxu0
    %153 = vdwg.mxu0
    %v156 = vunpack.c.l.b16 %v90
    %v157 = vunpack.c.l.b16 %v91
    %v158 = vpack.c.b16 %v157, %v156
    %v161 = vunpack.c.l.b16 %v92
    %v162 = vunpack.c.l.b16 %v93
    %v163 = vpack.c.b16 %v162, %v161
    %v166 = vsel %vm109, %v158, 0
    %168 = vmatprep.subr.bf16.mxu0 0
    %169 = vmatpush1.bf16.msra.mxu0 %v163
    %170 = vmatprep.subr.bf16.mxu0 0
    %171 = vmatpush1.bf16.msra.mxu0 0
    %172 = vmatprep.subr.bf16.mxu0 0
    %173 = vmatpush1.bf16.msra.mxu0 0
    %174 = vmatprep.subr.bf16.mxu0 0
    %175 = vmatpush1.bf16.msra.mxu0 0
    %176 = vmatprep.subr.bf16.mxu0 0
    %177 = vmatpush1.bf16.msra.mxu0 0
    %178 = vmatprep.subr.bf16.mxu0 0
    %179 = vmatpush1.bf16.msra.mxu0 0
    %180 = vmatprep.subr.bf16.mxu0 0
    %181 = vmatpush1.bf16.msra.mxu0 0
    %182 = vmatprep.subr.bf16.mxu0 0
    %183 = vmatpush1.bf16.msra.mxu0 0
    %184 = vmatprep.subr.bf16.mxu0 0
    %185 = vmatpush1.bf16.msra.mxu0 0
    %186 = vmatprep.subr.bf16.mxu0 0
    %187 = vmatpush1.bf16.msra.mxu0 0
    %188 = vmatprep.subr.bf16.mxu0 0
    %189 = vmatpush1.bf16.msra.mxu0 0
    %190 = vmatprep.subr.bf16.mxu0 0
    %191 = vmatpush1.bf16.msra.mxu0 0
    %192 = vmatprep.subr.bf16.mxu0 0
    %193 = vmatpush1.bf16.msra.mxu0 0
    %194 = vmatprep.subr.bf16.mxu0 0
    %195 = vmatpush1.bf16.msra.mxu0 0
    %196 = vmatprep.subr.bf16.mxu0 0
    %197 = vmatpush1.bf16.msra.mxu0 0
    %198 = vmatprep.subr.bf16.mxu0 0
    %199 = vmatpush1.bf16.msra.mxu0 0
    %200 = vmatprep.mubr.bf16.mxu0 0
    %201 = vmatmul.mubr.bf16.gmra.mrb[0].mxu0 %v166
    %v202 = vpop.f32.mrb[0].mxu0
    %v203 = vadd.f32 %v148, %v202
    %v204 = vpop.f32.mrb[0].mxu0
    %v205 = vpop.f32.mrb[0].mxu0
    %v206 = vadd.f32 %v151, %v205
    %v207 = vpop.f32.mrb[0].mxu0
    %208 = vdwg.mxu0
    %v209 = vld [vmem:[%s4] sm:$0x1]
    %v211 = vlaneseq
    %v212 = vshrl.u32 %v211, 7
    %v213 = vsub.s32 0, %v212
    %v214 = vrot.slane %v209, %v213
    %v216 = vadd.f32 %v203, %v214
    %v217 = vadd.f32 %v206, %v214
    %v218 = vmax.f32 %v216, 0.0
    %v219 = vmax.f32 %v217, 0.0
    %v220 = vpack.c.bf16 %v219, %v218
    %v221 = vld [vmem:[#allocation8] sm:$0xf]
    %v222 = vld [vmem:[#allocation8 + $0x4] sm:$0xf]
    %v223 = vld [vmem:[#allocation8 + $0x8] sm:$0xf]
    %v224 = vld [vmem:[#allocation8 + $0xc] sm:$0xf]
    %v225 = vld [vmem:[#allocation8 + $0x10] sm:$0xf]
    %v226 = vld [vmem:[#allocation8 + $0x14] sm:$0xf]
    %v227 = vld [vmem:[#allocation8 + $0x18] sm:$0xf]
    %v228 = vld [vmem:[#allocation8 + $0x1c] sm:$0xf]
    %v229 = vld [vmem:[#allocation8 + $0x20] sm:$0xf]
    %v230 = vld [vmem:[#allocation8 + $0x24] sm:$0xf]
    %v231 = vld [vmem:[#allocation8 + $0x28] sm:$0xf]
    %v232 = vld [vmem:[#allocation8 + $0x2c] sm:$0xf]
    %v233 = vld [vmem:[#allocation8 + $0x30] sm:$0xf]
    %v234 = vld [vmem:[#allocation8 + $0x34] sm:$0xf]
    %v235 = vld [vmem:[#allocation8 + $0x38] sm:$0xf]
    %v236 = vld [vmem:[#allocation8 + $0x3c] sm:$0xf]
    %v237 = vld [vmem:[%s6] sm:$0x1]
    %v239 = vlaneseq
    %v240 = vshrl.u32 %v239, 7
    %v241 = vsub.s32 0, %v240
    %v242 = vrot.slane %v237, %v241
    %v260 = vunpack.c.l.b16 %v221
    %v261 = vunpack.c.l.b16 %v222
    %v262 = vunpack.c.l.b16 %v223
    %v263 = vunpack.c.l.b16 %v224
    %v264 = vunpack.c.l.b16 %v225
    %v265 = vunpack.c.l.b16 %v226
    %v266 = vunpack.c.l.b16 %v227
    %v267 = vunpack.c.l.b16 %v228
    %v268 = vunpack.c.l.b16 %v229
    %v269 = vunpack.c.l.b16 %v230
    %v270 = vunpack.c.l.b16 %v231
    %v271 = vunpack.c.l.b16 %v232
    %v272 = vunpack.c.l.b16 %v233
    %v273 = vunpack.c.l.b16 %v234
    %v274 = vunpack.c.l.b16 %v235
    %v275 = vunpack.c.l.b16 %v236
    %v276 = vpack.c.b16 %v261, %v260
    %v277 = vpack.c.b16 %v263, %v262
    %v278 = vpack.c.b16 %v265, %v264
    %v279 = vpack.c.b16 %v267, %v266
    %v280 = vpack.c.b16 %v269, %v268
    %v281 = vpack.c.b16 %v271, %v270
    %v282 = vpack.c.b16 %v273, %v272
    %v283 = vpack.c.b16 %v275, %v274
    %292 = vmatprep.subr.bf16.mxu0 0
    %293 = vmatpush1.bf16.msra.mxu0 %v276
    %294 = vmatprep.subr.bf16.mxu0 0
    %295 = vmatpush1.bf16.msra.mxu0 %v277
    %296 = vmatprep.subr.bf16.mxu0 0
    %297 = vmatpush1.bf16.msra.mxu0 %v278
    %298 = vmatprep.subr.bf16.mxu0 0
    %299 = vmatpush1.bf16.msra.mxu0 %v279
    %300 = vmatprep.subr.bf16.mxu0 0
    %301 = vmatpush1.bf16.msra.mxu0 %v280
    %302 = vmatprep.subr.bf16.mxu0 0
    %303 = vmatpush1.bf16.msra.mxu0 %v281
    %304 = vmatprep.subr.bf16.mxu0 0
    %305 = vmatpush1.bf16.msra.mxu0 %v282
    %306 = vmatprep.subr.bf16.mxu0 0
    %307 = vmatpush1.bf16.msra.mxu0 %v283
    %308 = vmatprep.subr.bf16.mxu0 0
    %309 = vmatpush1.bf16.msra.mxu0 0
    %310 = vmatprep.subr.bf16.mxu0 0
    %311 = vmatpush1.bf16.msra.mxu0 0
    %312 = vmatprep.subr.bf16.mxu0 0
    %313 = vmatpush1.bf16.msra.mxu0 0
    %314 = vmatprep.subr.bf16.mxu0 0
    %315 = vmatpush1.bf16.msra.mxu0 0
    %316 = vmatprep.subr.bf16.mxu0 0
    %317 = vmatpush1.bf16.msra.mxu0 0
    %318 = vmatprep.subr.bf16.mxu0 0
    %319 = vmatpush1.bf16.msra.mxu0 0
    %320 = vmatprep.subr.bf16.mxu0 0
    %321 = vmatpush1.bf16.msra.mxu0 0
    %322 = vmatprep.subr.bf16.mxu0 0
    %323 = vmatpush1.bf16.msra.mxu0 0
    %324 = vmatprep.mubr.bf16.mxu0 0
    %325 = vmatmul.mubr.bf16.gmra.mrb[0].mxu0 %v220
    %v326 = vpop.f32.mrb[0].mxu0
    %v327 = vadd.f32 %v242, %v326
    %v328 = vpop.f32.mrb[0].mxu0
    %v329 = vpop.f32.mrb[0].mxu0
    %v330 = vadd.f32 %v242, %v329
    %v331 = vpop.f32.mrb[0].mxu0
    %332 = vdwg.mxu0
    %v333 = vmax.f32 %v327, 0.0
    %v334 = vmax.f32 %v330, 0.0
    %v335 = vld [vmem:[%s7] sm:$0x1]
    %v337 = vlaneseq
    %v338 = vshrl.u32 %v337, 7
    %v339 = vsub.s32 0, %v338
    %v340 = vrot.slane %v335, %v339
    %v342 = vmul.f32 %v333, %v340
    %v343 = vmul.f32 %v334, %v340
    %344 = vadd.xlane.f32.xlu0 %v342
    %v345 = vpop.xlane.xlu0 %344
    %346 = vadd.xlane.f32.xlu0 %v343
    %v347 = vpop.xlane.xlu0 %346
    %v348 = vld [vmem:[#allocation2] sm:$0x1]
    %v350 = vlaneseq
    %v351 = vshrl.u32 %v350, 7
    %v352 = vsub.s32 0, %v351
    %v353 = vrot.slane %v348, %v352
    %v355 = vadd.f32 %v345, %v353
    %v356 = vadd.f32 %v347, %v353
    %vm357 = vcmask 7168
    %358 = vst.msk [vmem:[%s9] sm:$0xff] %vm357, %v355
    %359 = vst.msk [vmem:[%s9 + $0x8] sm:$0xff] %vm357, %v356
    // Predicated region
    $region54: #{tpu_custom_call.1} parent=1 // pred_check
      _
    $region55: #{tpu_custom_call.1} parent=1 // pred_check_branch
      %361 = sbr.rel (0) target = $region57
    $region56: #{tpu_custom_call.1} parent=1 // pred_region
      _
    $region57: #{tpu_custom_call.1} parent=1 // pred_fallthru
      _
    // Predicated region
    $region58: #{tpu_custom_call.1} parent=1 // pred_check
      _
    $region59: #{tpu_custom_call.1} parent=1 // pred_check_branch
      %363 = sbr.rel (0) target = $region61
    $region60: #{tpu_custom_call.1} parent=1 // pred_region
      _
    $region61: #{tpu_custom_call.1} parent=1 // pred_fallthru
      _
    %364 = vsyncpa [#allocation4], 1
    %365 = vsyncpa [#allocation6], 1
    %366 = vsyncpa [#allocation9], 1

</llo_original>
